<compile_context>
chip_gen: v6e
topology: v6e:2x2x1
jax: 0.10.0
libtpu: 0.0.40
codegen_flags: <defaults>
</compile_context>

<pallas_src>
import functools

import jax
import jax.numpy as jnp
from jax.experimental import pallas as pl
from jax.experimental.pallas import tpu as pltpu

EPS = 1e-5
LANE = 128
HALO = 16          # halo fetch granularity along L (full bf16 sublane tile, multiple of 8)


# ----------------------------------------------------------------------------- utils
def _choose_tile_l(L, cap=512):
    """Split L into near-equal chunks of at most `cap` rows, rounded up to a multiple of 16."""
    n_chunks = -(-L // cap)
    return -(-L // (n_chunks * HALO)) * HALO


def _vmem_limit_bytes():
    """Per-generation scoped-VMEM limit (v5e/v6e: 128 MiB physical, v7x: 64 MiB)."""
    try:
        phys = pltpu.get_tpu_info().vmem_capacity_bytes
    except Exception:
        phys = 64 * 1024 * 1024
    return int(min(phys * 3 // 4, 100 * 1024 * 1024))


def _pack_w(w, Cp, dtype):
    """w: (3, C_in, C_out) -> zero-padded (3, Cp, Cp) in the MXU compute dtype."""
    C = w.shape[1]
    W = jnp.zeros((3, Cp, Cp), jnp.float32).at[:, :C, :C].set(w.astype(jnp.float32))
    return W.astype(dtype)


def _bn_scale_shift(stats_tiles, count, gamma, beta, C, Cp):
    """Reduce per-tile [sum, sumsq] partials -> per-channel BN scale/shift (s, t)."""
    stats = jnp.sum(stats_tiles.astype(jnp.float32), axis=(0, 1))   # (2, Cp) global sums
    mean = stats[0] / count
    # NOTE(review): one-pass E[x^2]-mean^2 can cancel when |mean| >> std; conv outputs under
    # training-mode BN are near zero-mean so f32 is adequate here; clamp guards tiny negatives.
    var = jnp.maximum(stats[1] / count - mean * mean, 0.0)
    g = jnp.zeros((Cp,), jnp.float32).at[:C].set(jnp.reshape(gamma, (-1,)).astype(jnp.float32))
    b = jnp.zeros((Cp,), jnp.float32).at[:C].set(jnp.reshape(beta, (-1,)).astype(jnp.float32))
    s = g * jax.lax.rsqrt(var + EPS)
    t = b - mean * s
    return s.reshape(1, Cp), t.reshape(1, Cp)


# ----------------------------------------------------------------------------- kernels
def _conv3(window, w_ref):
    """window: (TL+2, Cp) conv input rows [base-1, base+TL+1). 3 accumulated K=Cp MXU dots
    with f32 accumulation (no im2col slab materialisation)."""
    tl = window.shape[0] - 2
    h = jnp.dot(window[0:tl, :], w_ref[0], preferred_element_type=jnp.float32)
    h = h + jnp.dot(window[1:tl + 1, :], w_ref[1], preferred_element_type=jnp.float32)
    h = h + jnp.dot(window[2:tl + 2, :], w_ref[2], preferred_element_type=jnp.float32)
    return h                                                          # (TL, Cp) f32


def _partial_stats(h):
    return jnp.concatenate(
        [jnp.sum(h, axis=0, keepdims=True), jnp.sum(h * h, axis=0, keepdims=True)], axis=0)


def conv1_kernel(x_ref, xp_ref, xn_ref, w_ref, h_ref, stats_ref, *, TL, L, Lp, cdt):
    lt = pl.program_id(1)
    n_tiles = Lp // TL
    center = x_ref[...]                                               # aligned (TL, Cp) f32
    # conv zero padding at global rows -1 / Lp; interior tiles take the neighbour halo row.
    prev_row = jnp.where(lt > 0, xp_ref[HALO - 1:HALO, :], 0.0)       # x[base-1]
    next_row = jnp.where(lt < n_tiles - 1, xn_ref[0:1, :], 0.0)       # x[base+TL]
    window = jnp.concatenate([prev_row, center, next_row], axis=0).astype(cdt)
    h = _conv3(window, w_ref)
    h_ref[...] = h.astype(h_ref.dtype)
    if Lp > L:                                  # keep padded tail rows out of the BN stats
        row = lt * TL + jax.lax.broadcasted_iota(jnp.int32, (TL, 1), 0)
        h = jnp.where(row < L, h, 0.0)
    stats_ref[...] = _partial_stats(h)


def conv2_kernel(h1_ref, hp_ref, hn_ref, s_ref, t_ref, w_ref, h2_ref, stats_ref,
                 *, TL, L, Lp, cdt):
    lt = pl.program_id(1)
    n_tiles = Lp // TL
    s = s_ref[...]
    t = t_ref[...]

    def bn_relu(v):   # fused BN1 (folded scale/shift) + ReLU, f32 math (no bf16 VPU on v5e)
        return jnp.maximum(v.astype(jnp.float32) * s + t, 0.0)

    center = bn_relu(h1_ref[...])                                     # (TL, Cp)
    valid = None
    if Lp > L:        # conv2's zero padding must hold past the true row L-1 (tail tile only)
        row = lt * TL + jax.lax.broadcasted_iota(jnp.int32, (TL, 1), 0)
        valid = row < L
        center = jnp.where(valid, center, 0.0)
    prev_row = jnp.where(lt > 0, bn_relu(hp_ref[HALO - 1:HALO, :]), 0.0)
    next_row = jnp.where(lt < n_tiles - 1, bn_relu(hn_ref[0:1, :]), 0.0)
    window = jnp.concatenate([prev_row, center, next_row], axis=0).astype(cdt)
    h = _conv3(window, w_ref)
    h2_ref[...] = h.astype(h2_ref.dtype)
    if valid is not None:
        h = jnp.where(valid, h, 0.0)
    stats_ref[...] = _partial_stats(h)


def residual_kernel(x_ref, h2_ref, s_ref, t_ref, o_ref):
    # fused BN2 scale/shift + residual add + ReLU (f32 math, lane-dense stores)
    o_ref[...] = jnp.maximum(
        x_ref[...] + h2_ref[...].astype(jnp.float32) * s_ref[...] + t_ref[...], 0.0
    ).astype(o_ref.dtype)


# ----------------------------------------------------------------------------- forward
def resblock_forward(x_ncl, params, compute_dtype=jnp.bfloat16, tile_cap=512):
    """x_ncl: (N, C, L) float32, PyTorch convention. Returns (N, C, L) float32."""
    w1, b1, g1, be1, w2, b2, g2, be2 = params
    # Conv biases cancel under training-mode BN (mean subtraction). Invalid for eval-mode BN.
    del b1, b2
    N, C, L = x_ncl.shape
    Cp = ((C + LANE - 1) // LANE) * LANE          # lane-dense channel padding
    TL = _choose_tile_l(L, tile_cap)
    NLT = -(-L // TL)
    Lp = NLT * TL
    R = TL // HALO                                 # HALO-blocks per tile
    NH = Lp // HALO                                # HALO-blocks total
    count = jnp.float32(N * L)

    # Single prologue relayout: (N,C,L) -> channels-last (N, Lp, Cp); the L pad and the
    # channel pad share one op (no separate halo-pad HBM round-trips anywhere).
    x = jnp.transpose(x_ncl, (0, 2, 1)).astype(jnp.float32)
    x = jnp.pad(x, ((0, 0), (0, Lp - L), (0, Cp - C)))

    W1 = _pack_w(w1, Cp, compute_dtype)
    W2 = _pack_w(w2, Cp, compute_dtype)

    cparams = pltpu.CompilerParams(
        dimension_semantics=("parallel", "parallel"),   # halo-tiled -> both axes shardable
        vmem_limit_bytes=_vmem_limit_bytes(),
    )

    tile_spec = pl.BlockSpec((None, TL, Cp), lambda n, lt: (n, lt, 0))
    prev_spec = pl.BlockSpec((None, HALO, Cp),
                             lambda n, lt: (n, jnp.maximum(lt * R - 1, 0), 0))
    next_spec = pl.BlockSpec((None, HALO, Cp),
                             lambda n, lt: (n, jnp.minimum((lt + 1) * R, NH - 1), 0))
    w_spec = pl.BlockSpec((3, Cp, Cp), lambda n, lt: (0, 0, 0))
    vec_spec = pl.BlockSpec((1, Cp), lambda n, lt: (0, 0))
    stats_spec = pl.BlockSpec((None, None, 2, Cp), lambda n, lt: (n, lt, 0, 0))

    h_shape = jax.ShapeDtypeStruct((N, Lp, Cp), compute_dtype)
    st_shape = jax.ShapeDtypeStruct((N, NLT, 2, Cp), jnp.float32)
    grid = (N, NLT)

    # ---- pass 1: conv1 (halo tiles, 3 accumulated MXU dots) + per-tile BN1 partial stats ----
    h1, st1 = pl.pallas_call(
        functools.partial(conv1_kernel, TL=TL, L=L, Lp=Lp, cdt=compute_dtype),
        grid=grid,
        in_specs=[tile_spec, prev_spec, next_spec, w_spec],
        out_specs=(tile_spec, stats_spec),
        out_shape=(h_shape, st_shape),
        compiler_params=cparams,
    )(x, x, x, W1)
    s1, t1 = _bn_scale_shift(st1, count, g1, be1, C, Cp)

    # ---- pass 2: fused BN1+ReLU + conv2 + per-tile BN2 partial stats ----
    h2, st2 = pl.pallas_call(
        functools.partial(conv2_kernel, TL=TL, L=L, Lp=Lp, cdt=compute_dtype),
        grid=grid,
        in_specs=[tile_spec, prev_spec, next_spec, vec_spec, vec_spec, w_spec],
        out_specs=(tile_spec, stats_spec),
        out_shape=(h_shape, st_shape),
        compiler_params=cparams,
    )(h1, h1, h1, s1, t1, W2)
    s2, t2 = _bn_scale_shift(st2, count, g2, be2, C, Cp)

    # ---- pass 3: fused BN2 + residual add + ReLU ----
    out = pl.pallas_call(
        residual_kernel,
        grid=grid,
        in_specs=[tile_spec, tile_spec, vec_spec, vec_spec],
        out_specs=tile_spec,
        out_shape=jax.ShapeDtypeStruct((N, Lp, Cp), jnp.float32),
        compiler_params=cparams,
    )(x, h2, s2, t2)

    return jnp.transpose(out[:, :L, :C], (0, 2, 1))     # back to (N, C, L)


# ----------------------------------------------------------------------------- reference
def reference_forward(x_ncl, params):
    """Pure-JAX reference of the PyTorch ResBlock forward (training-mode BN, with biases)."""
    w1, b1, g1, be1, w2, b2, g2, be2 = params
    x = jnp.transpose(x_ncl, (0, 2, 1)).astype(jnp.float32)
    L = x.shape[1]

    def conv(h, w, b):
        hp = jnp.pad(h, ((0, 0), (1, 1), (0, 0)))
        return sum(jnp.einsum('nlc,cd->nld', hp[:, k:k + L, :], w[k])
                   for k in range(3)) + b[None]

    def bn(h, g, be):
        m = h.mean(axis=(0, 1), keepdims=True)
        v = ((h - m) ** 2).mean(axis=(0, 1), keepdims=True)
        return (h - m) * jax.lax.rsqrt(v + EPS) * g[None] + be[None]

    h = jax.nn.relu(bn(conv(x, w1, b1), g1, be1))
    h = bn(conv(h, w2, b2), g2, be2)
    return jnp.transpose(jax.nn.relu(x + h), (0, 2, 1))


def init_params(key, ch):
    """Deterministic parameter init mirroring nn.Conv1d / nn.BatchNorm1d shapes."""
    k1, k2, k3, k4, k5, k6 = jax.random.split(key, 6)
    bound = 1.0 / ((ch * 3) ** 0.5)
    # conv weights stored as (kernel=3, c_in, c_out) == torch (c_out, c_in, k) transposed
    w1 = jax.random.uniform(k1, (3, ch, ch), jnp.float32, -bound, bound)
    b1 = jax.random.uniform(k2, (1, ch), jnp.float32, -bound, bound)
    w2 = jax.random.uniform(k3, (3, ch, ch), jnp.float32, -bound, bound)
    b2 = jax.random.uniform(k4, (1, ch), jnp.float32, -bound, bound)
    g1 = 1.0 + 0.1 * jax.random.normal(k5, (1, ch), jnp.float32)
    be1 = jnp.zeros((1, ch), jnp.float32)
    g2 = 1.0 + 0.1 * jax.random.normal(k6, (1, ch), jnp.float32)
    be2 = jnp.zeros((1, ch), jnp.float32)
    return (w1, b1, g1, be1, w2, b2, g2, be2)


if __name__ == "__main__":
    key = jax.random.PRNGKey(0)
    kx, kp, kx2 = jax.random.split(key, 3)

    # Main check: small shape, both compute dtypes.
    N, C, L = 2, 4, 16
    x = jax.random.normal(kx, (N, C, L), jnp.float32)
    params = init_params(kp, C)
    ref = reference_forward(x, params)

    out_f32 = jax.block_until_ready(resblock_forward(x, params, compute_dtype=jnp.float32))
    assert out_f32.shape == (N, C, L)
    assert jnp.allclose(out_f32, ref, rtol=1e-2, atol=2e-2), "f32 Pallas kernel mismatch"

    out_bf16 = jax.block_until_ready(resblock_forward(x, params, compute_dtype=jnp.bfloat16))
    assert jnp.allclose(out_bf16, ref, rtol=3e-2, atol=5e-2), "bf16 Pallas kernel mismatch"

    # Secondary check: multi-tile grid with ragged L (exercises halo rows + tail masking).
    N2, L2 = 2, 72
    x2 = jax.random.normal(kx2, (N2, C, L2), jnp.float32)
    ref2 = reference_forward(x2, params)
    out2 = jax.block_until_ready(
        resblock_forward(x2, params, compute_dtype=jnp.float32, tile_cap=32))
    assert out2.shape == (N2, C, L2)
    assert jnp.allclose(out2, ref2, rtol=1e-2, atol=2e-2), "multi-tile Pallas kernel mismatch"

    print("KERNEL_OK")
</pallas_src>

<mosaic_0001>
module attributes {stable_mosaic.version = 11 : i64} {
  func.func @conv1_kernel(%arg0: i32, %arg1: i32, %arg2: memref<1x16x128xf32, #tpu.memory_space<vmem>>, %arg3: memref<1x16x128xf32, #tpu.memory_space<vmem>>, %arg4: memref<1x16x128xf32, #tpu.memory_space<vmem>>, %arg5: memref<3x128x128xf32, #tpu.memory_space<vmem>>, %arg6: memref<1x16x128xf32, #tpu.memory_space<vmem>>, %arg7: memref<1x1x2x128xf32, #tpu.memory_space<vmem>>) attributes {dimension_semantics = [#tpu.dimension_semantics<parallel>, #tpu.dimension_semantics<parallel>], iteration_bounds = array<i64: 2, 1>, scalar_prefetch = 0 : i64, scratch_operands = 0 : i64, tpu.core_type = #tpu.core_type<tc>, window_params = [{transform_indices = @transform_0, window_bounds = array<i64: 1, 16, 128>}, {transform_indices = @transform_1, window_bounds = array<i64: 1, 16, 128>}, {transform_indices = @transform_2, window_bounds = array<i64: 1, 16, 128>}, {pipeline_mode = #tpu.pipeline_mode<synchronous>, transform_indices = @transform_3, window_bounds = array<i64: 3, 128, 128>}, {transform_indices = @transform_4, window_bounds = array<i64: 1, 16, 128>}, {transform_indices = @transform_5, window_bounds = array<i64: 1, 1, 2, 128>}]} {
    %c0 = arith.constant 0 : index
    %c0_0 = arith.constant 0 : index
    %c0_1 = arith.constant 0 : index
    %0 = vector.load %arg2[%c0, %c0_0, %c0_1] : memref<1x16x128xf32, #tpu.memory_space<vmem>>, vector<1x16x128xf32>
    %1 = vector.shape_cast %0 : vector<1x16x128xf32> to vector<16x128xf32>
    %c0_i32 = arith.constant 0 : i32
    %2 = arith.cmpi sgt, %arg1, %c0_i32 : i32
    %c0_2 = arith.constant 0 : index
    %c15 = arith.constant 15 : index
    %c0_3 = arith.constant 0 : index
    %3 = vector.load %arg3[%c0_2, %c15, %c0_3] : memref<1x16x128xf32, #tpu.memory_space<vmem>>, vector<1x1x128xf32>
    %4 = vector.shape_cast %3 : vector<1x1x128xf32> to vector<1x128xf32>
    %cst = arith.constant 0.000000e+00 : f32
    %5 = vector.broadcast %cst : f32 to vector<1x128xf32>
    %6 = arith.select %2, %4, %5 : vector<1x128xf32>
    %c0_i32_4 = arith.constant 0 : i32
    %7 = arith.cmpi slt, %arg1, %c0_i32_4 : i32
    %c0_5 = arith.constant 0 : index
    %c0_6 = arith.constant 0 : index
    %c0_7 = arith.constant 0 : index
    %8 = vector.load %arg4[%c0_5, %c0_6, %c0_7] : memref<1x16x128xf32, #tpu.memory_space<vmem>>, vector<1x1x128xf32>
    %9 = vector.shape_cast %8 : vector<1x1x128xf32> to vector<1x128xf32>
    %cst_8 = arith.constant 0.000000e+00 : f32
    %10 = vector.broadcast %cst_8 : f32 to vector<1x128xf32>
    %11 = arith.select %7, %9, %10 : vector<1x128xf32>
    %12 = tpu.concatenate %6, %1, %11 in 0 : vector<1x128xf32>, vector<16x128xf32>, vector<1x128xf32> -> vector<18x128xf32>
    %13 = vector.extract_strided_slice %12 {offsets = [0, 0], sizes = [16, 128], strides = [1, 1]} : vector<18x128xf32> to vector<16x128xf32>
    %c0_9 = arith.constant 0 : index
    %c0_10 = arith.constant 0 : index
    %c0_11 = arith.constant 0 : index
    %14 = vector.load %arg5[%c0_9, %c0_10, %c0_11] : memref<3x128x128xf32, #tpu.memory_space<vmem>>, vector<1x128x128xf32>
    %15 = vector.shape_cast %14 : vector<1x128x128xf32> to vector<128x128xf32>
    %cst_12 = arith.constant dense<0.000000e+00> : vector<16x128xf32>
    %16 = tpu.matmul %13, %15, %cst_12 {dimension_numbers = #tpu.dot_dimension_numbers<[1], [0], [0], [1], [0, 0, 1, 1], [], []>} : vector<16x128xf32>, vector<128x128xf32>, vector<16x128xf32> -> vector<16x128xf32>
    %17 = vector.extract_strided_slice %12 {offsets = [1, 0], sizes = [16, 128], strides = [1, 1]} : vector<18x128xf32> to vector<16x128xf32>
    %c1 = arith.constant 1 : index
    %c0_13 = arith.constant 0 : index
    %c0_14 = arith.constant 0 : index
    %18 = vector.load %arg5[%c1, %c0_13, %c0_14] : memref<3x128x128xf32, #tpu.memory_space<vmem>>, vector<1x128x128xf32>
    %19 = vector.shape_cast %18 : vector<1x128x128xf32> to vector<128x128xf32>
    %cst_15 = arith.constant dense<0.000000e+00> : vector<16x128xf32>
    %20 = tpu.matmul %17, %19, %cst_15 {dimension_numbers = #tpu.dot_dimension_numbers<[1], [0], [0], [1], [0, 0, 1, 1], [], []>} : vector<16x128xf32>, vector<128x128xf32>, vector<16x128xf32> -> vector<16x128xf32>
    %21 = arith.addf %16, %20 : vector<16x128xf32>
    %22 = vector.extract_strided_slice %12 {offsets = [2, 0], sizes = [16, 128], strides = [1, 1]} : vector<18x128xf32> to vector<16x128xf32>
    %c2 = arith.constant 2 : index
    %c0_16 = arith.constant 0 : index
    %c0_17 = arith.constant 0 : index
    %23 = vector.load %arg5[%c2, %c0_16, %c0_17] : memref<3x128x128xf32, #tpu.memory_space<vmem>>, vector<1x128x128xf32>
    %24 = vector.shape_cast %23 : vector<1x128x128xf32> to vector<128x128xf32>
    %cst_18 = arith.constant dense<0.000000e+00> : vector<16x128xf32>
    %25 = tpu.matmul %22, %24, %cst_18 {dimension_numbers = #tpu.dot_dimension_numbers<[1], [0], [0], [1], [0, 0, 1, 1], [], []>} : vector<16x128xf32>, vector<128x128xf32>, vector<16x128xf32> -> vector<16x128xf32>
    %26 = arith.addf %21, %25 : vector<16x128xf32>
    %c0_19 = arith.constant 0 : index
    %c0_20 = arith.constant 0 : index
    %c0_21 = arith.constant 0 : index
    %27 = vector.load %arg6[%c0_19, %c0_20, %c0_21] : memref<1x16x128xf32, #tpu.memory_space<vmem>>, vector<1x16x128xf32>
    %28 = vector.shape_cast %27 : vector<1x16x128xf32> to vector<16x128xf32>
    %29 = vector.shape_cast %26 : vector<16x128xf32> to vector<1x16x128xf32>
    tpu.vector_store %arg6[%c0_19, %c0_20, %c0_21], %29 {strides = array<i32>} : memref<1x16x128xf32, #tpu.memory_space<vmem>>, vector<1x16x128xf32>,
    %cst_22 = arith.constant dense<0.000000e+00> : vector<128xf32>
    %30 = vector.multi_reduction <add>, %26, %cst_22 [0] : vector<16x128xf32> to vector<128xf32>
    %31 = vector.shape_cast %30 : vector<128xf32> to vector<1x128xf32>
    %32 = arith.mulf %26, %26 : vector<16x128xf32>
    %cst_23 = arith.constant dense<0.000000e+00> : vector<128xf32>
    %33 = vector.multi_reduction <add>, %32, %cst_23 [0] : vector<16x128xf32> to vector<128xf32>
    %34 = vector.shape_cast %33 : vector<128xf32> to vector<1x128xf32>
    %35 = tpu.concatenate %31, %34 in 0 : vector<1x128xf32>, vector<1x128xf32> -> vector<2x128xf32>
    %c0_24 = arith.constant 0 : index
    %c0_25 = arith.constant 0 : index
    %c0_26 = arith.constant 0 : index
    %c0_27 = arith.constant 0 : index
    %36 = vector.load %arg7[%c0_24, %c0_25, %c0_26, %c0_27] : memref<1x1x2x128xf32, #tpu.memory_space<vmem>>, vector<1x1x2x128xf32>
    %37 = vector.shape_cast %36 : vector<1x1x2x128xf32> to vector<2x128xf32>
    %38 = vector.shape_cast %35 : vector<2x128xf32> to vector<1x1x2x128xf32>
    tpu.vector_store %arg7[%c0_24, %c0_25, %c0_26, %c0_27], %38 {strides = array<i32>} : memref<1x1x2x128xf32, #tpu.memory_space<vmem>>, vector<1x1x2x128xf32>,
    return
  }
  func.func @transform_0(%arg0: i32, %arg1: i32) -> (i32, i32, i32) {
    %c0_i32 = arith.constant 0 : i32
    %c0_i32_0 = arith.constant 0 : i32
    return %arg0, %arg1, %c0_i32 : i32, i32, i32
  }
  func.func @transform_1(%arg0: i32, %arg1: i32) -> (i32, i32, i32) {
    %c1_i32 = arith.constant 1 : i32
    %0 = arith.muli %arg1, %c1_i32 : i32
    %c1_i32_0 = arith.constant 1 : i32
    %1 = arith.subi %0, %c1_i32_0 : i32
    %c0_i32 = arith.constant 0 : i32
    %2 = arith.maxsi %1, %c0_i32 : i32
    %c0_i32_1 = arith.constant 0 : i32
    %c0_i32_2 = arith.constant 0 : i32
    return %arg0, %2, %c0_i32_1 : i32, i32, i32
  }
  func.func @transform_2(%arg0: i32, %arg1: i32) -> (i32, i32, i32) {
    %c1_i32 = arith.constant 1 : i32
    %0 = arith.addi %arg1, %c1_i32 : i32
    %c1_i32_0 = arith.constant 1 : i32
    %1 = arith.muli %0, %c1_i32_0 : i32
    %c0_i32 = arith.constant 0 : i32
    %2 = arith.minsi %1, %c0_i32 : i32
    %c0_i32_1 = arith.constant 0 : i32
    %c0_i32_2 = arith.constant 0 : i32
    return %arg0, %2, %c0_i32_1 : i32, i32, i32
  }
  func.func @transform_3(%arg0: i32, %arg1: i32) -> (i32, i32, i32) {
    %c0_i32 = arith.constant 0 : i32
    %c0_i32_0 = arith.constant 0 : i32
    %c0_i32_1 = arith.constant 0 : i32
    %c0_i32_2 = arith.constant 0 : i32
    return %c0_i32, %c0_i32_0, %c0_i32_1 : i32, i32, i32
  }
  func.func @transform_4(%arg0: i32, %arg1: i32) -> (i32, i32, i32) {
    %c0_i32 = arith.constant 0 : i32
    %c0_i32_0 = arith.constant 0 : i32
    return %arg0, %arg1, %c0_i32 : i32, i32, i32
  }
  func.func @transform_5(%arg0: i32, %arg1: i32) -> (i32, i32, i32, i32) {
    %c0_i32 = arith.constant 0 : i32
    %c0_i32_0 = arith.constant 0 : i32
    %c0_i32_1 = arith.constant 0 : i32
    return %arg0, %arg1, %c0_i32, %c0_i32_0 : i32, i32, i32, i32
  }
}

</mosaic_0001>

<llo_original>
// kernel: tpu_custom_call.1
$region0: #{tpu_custom_call.1}
  #allocation0 [shape = 'u32[]', space=smem, size = 0x4, offset = 0x4, fixed_abs, tag = 'smem constant byte address 0x4 - core index']
  #allocation1 [shape = 'u32[144,128]{1,0:T(1,128)}', space=vmem, size = 0x12000, scoped, tag = 'internal scratch']
  %s0 = inlined_call_operand.hbm [shape: f32[2,16,128], index: 0, kind: input, shape index: {}]
  %s1 = inlined_call_operand.hbm [shape: f32[2,16,128], index: 1, kind: input, shape index: {}]
  %s2 = inlined_call_operand.hbm [shape: f32[2,16,128], index: 2, kind: input, shape index: {}]
  %s3 = inlined_call_operand.hbm [shape: f32[3,128,128], index: 3, kind: input, shape index: {}]
  %s4 = inlined_call_operand.hbm [shape: f32[2,16,128], index: 4, kind: output, shape index: {0}]
  %s5 = inlined_call_operand.hbm [shape: f32[2,1,2,128], index: 5, kind: output, shape index: {1}]
  %6 = xla_tuple %s4, %s5
  %s7 = sld [smem:[#allocation0]]
  $region73: #{tpu_custom_call.1} parent=0
    _
  %s9 = ssub.s32 1, %s7
  %s10 = scalar_select 0, %s9, %s7
  $region1: #{tpu_custom_call.1} parent=0
    #allocation2 [shape = 'u8[16384]{0}', space=vmem, size = 0x4000, scoped, tag = 'input window, operand 0']
    #allocation3 [shape = 's32[2]{0}', space=sflag, size = 0x8, scoped, tag = 'scoped memory for tpu_custom_call.1']
    #allocation4 [shape = 's32[2]{0}', space=sflag, size = 0x8, scoped, tag = 'scoped memory for tpu_custom_call.1']
    #allocation5 [shape = 'u8[16384]{0}', space=vmem, size = 0x4000, scoped, tag = 'input window, operand 1']
    #allocation6 [shape = 's32[2]{0}', space=sflag, size = 0x8, scoped, tag = 'scoped memory for tpu_custom_call.1']
    #allocation7 [shape = 'u8[16384]{0}', space=vmem, size = 0x4000, scoped, tag = 'input window, operand 2']
    #allocation8 [shape = 'u8[196608]{0}', space=vmem, size = 0x30000, scoped, tag = 'input window, operand 3, single buffered']
    #allocation9 [shape = 's32[1]{0}', space=sflag, size = 0x4, scoped, tag = 'scoped memory for tpu_custom_call.1']
    #allocation10 [shape = 'u8[16384]{0}', space=vmem, size = 0x4000, scoped, tag = 'output window, operand 0']
    #allocation11 [shape = 'u8[2048]{0}', space=vmem, size = 0x800, scoped, tag = 'output window, operand 1']
    #allocation12 [shape = 's32[2]{0}', space=sflag, size = 0x8, scoped, tag = 'scoped memory for tpu_custom_call.1']
    %11 = vsyncpa [#allocation3], 0
    %s12 = scalar_lea.sflag [#allocation3], 1
    %13 = vsyncpa %s12, 0
    %14 = vsyncpa [#allocation6], 0
    %s15 = scalar_lea.sflag [#allocation6], 1
    %16 = vsyncpa %s15, 0
    %17 = vsyncpa [#allocation9], 0
    %18 = vsyncpa [#allocation4], 0
    %s19 = scalar_lea.sflag [#allocation4], 1
    %20 = vsyncpa %s19, 0
    %21 = vsyncpa [#allocation12], 0
    %s22 = scalar_lea.sflag [#allocation12], 1
    %23 = vsyncpa %s22, 0
    loop: start=0, step=1, limit=4
    $region2: #{tpu_custom_call.1} parent=1 // loop_pre_header
      _
    $region3: #{tpu_custom_call.1} parent=1 // loop_header
      %s25 = sphi 0, %s29
      %p26 = scmp.ge.s32.totalorder %s25, 4
      %s32 = sphi 0, %s44
      %s33 = sphi 0, %s40
      %s34 = sphi 0, %s32
      %s35 = sphi 0, %s33
      %s36 = sphi 0, %s34
      %s37 = sphi 0, %s35
      %s49 = sphi 0, %s51
      %s52 = sphi 0, %s49
      %s53 = sphi 0, %s52
      %s69 = sphi 0, %s53
      %s83 = sphi 0, %s85
      %s86 = sphi 0, %s83
      %s87 = sphi 0, %s86
      %s103 = sphi 0, %s87
      %s117 = sphi 0, %s119
      %s120 = sphi 0, %s117
      %s121 = sphi 0, %s120
      %s137 = sphi 0, %s121
      %s141 = sphi 0, %s141
      %s143 = sphi 0, %s141
      %s144 = sphi 0, %s143
      %s158 = sphi 0, %s144
      %s166 = sphi 0, %s168
      %s169 = sphi 0, %s166
      %s170 = sphi 0, %s169
      %s186 = sphi 0, %s170
      %s194 = sphi 0, %s196
      %s197 = sphi 0, %s194
      %s198 = sphi 0, %s197
      %s214 = sphi 0, %s198
    $region4: #{tpu_custom_call.1} parent=1 // loop_header_branch
      %28 = sbr.rel (%p26) target = $region8
    $region5: #{tpu_custom_call.1} parent=1 // loop_body
      %s30 = ssub.s32 %s25, 1
      %s31 = ssub.s32 %s25, 2
      %s38 = sadd.s32 1, %s33
      %p39 = scmp.ge.s32.totalorder %s38, 1
      %s40 = scalar_select %p39, 0, %s38
      %s41 = sadd.s32 1, %s32
      %s42 = scalar_select %p39, %s41, %s32
      %p43 = scmp.ge.s32.totalorder %s42, 2
      %s44 = scalar_select %p43, 0, %s42
      %s45 = ssub.s32 %s32, %s44
      %s46 = ssub.s32 %s33, %s40
      %s47 = sor.u32 %s45, %s46
      %p48 = scmp.eq.s32.totalorder %s47, 0
      %s50 = sadd.s32 %s49, 1
      %s51 = scalar_select %p48, %s49, %s50
      %p54 = pneg %p48
      %p55 = scmp.eq.s32.totalorder %s25, 1
      %p56 = por %p54, %p55
      %p57 = scmp.ne.s32.totalorder %s49, %s52
      %p58 = scmp.eq.s32.totalorder %s25, 0
      %p59 = por %p57, %p58
      %p60 = scmp.ne.s32.totalorder %s49, %s52
      %p61 = scmp.eq.s32.totalorder %s30, 1
      %p62 = por %p60, %p61
      %p63 = scmp.ne.s32.totalorder %s52, %s53
      %p64 = scmp.eq.s32.totalorder %s30, 0
      %p65 = por %p63, %p64
      %p66 = scmp.ne.s32.totalorder %s52, %s53
      %p67 = scmp.eq.s32.totalorder %s31, 1
      %p68 = por %p66, %p67
      %p70 = scmp.ne.s32.totalorder %s53, %s69
      %p71 = scmp.eq.s32.totalorder %s31, 0
      %p72 = por %p70, %p71
      %s73 = ssub.s32 %s33, 1
      %p74 = scmp.gt.s32.totalorder %s73, 0
      %s75 = scalar_select %p74, %s73, 0
      %s76 = ssub.s32 %s40, 1
      %p77 = scmp.gt.s32.totalorder %s76, 0
      %s78 = scalar_select %p77, %s76, 0
      %s79 = ssub.s32 %s32, %s44
      %s80 = ssub.s32 %s75, %s78
      %s81 = sor.u32 %s79, %s80
      %p82 = scmp.eq.s32.totalorder %s81, 0
      %s84 = sadd.s32 %s83, 1
      %s85 = scalar_select %p82, %s83, %s84
      %p88 = pneg %p82
      %p89 = scmp.eq.s32.totalorder %s25, 1
      %p90 = por %p88, %p89
      %p91 = scmp.ne.s32.totalorder %s83, %s86
      %p92 = scmp.eq.s32.totalorder %s25, 0
      %p93 = por %p91, %p92
      %p94 = scmp.ne.s32.totalorder %s83, %s86
      %p95 = scmp.eq.s32.totalorder %s30, 1
      %p96 = por %p94, %p95
      %p97 = scmp.ne.s32.totalorder %s86, %s87
      %p98 = scmp.eq.s32.totalorder %s30, 0
      %p99 = por %p97, %p98
      %p100 = scmp.ne.s32.totalorder %s86, %s87
      %p101 = scmp.eq.s32.totalorder %s31, 1
      %p102 = por %p100, %p101
      %p104 = scmp.ne.s32.totalorder %s87, %s103
      %p105 = scmp.eq.s32.totalorder %s31, 0
      %p106 = por %p104, %p105
      %s107 = sadd.s32 %s33, 1
      %p108 = scmp.lt.s32.totalorder %s107, 0
      %s109 = scalar_select %p108, %s107, 0
      %s110 = sadd.s32 %s40, 1
      %p111 = scmp.lt.s32.totalorder %s110, 0
      %s112 = scalar_select %p111, %s110, 0
      %s113 = ssub.s32 %s32, %s44
      %s114 = ssub.s32 %s109, %s112
      %s115 = sor.u32 %s113, %s114
      %p116 = scmp.eq.s32.totalorder %s115, 0
      %s118 = sadd.s32 %s117, 1
      %s119 = scalar_select %p116, %s117, %s118
      %p122 = pneg %p116
      %p123 = scmp.eq.s32.totalorder %s25, 1
      %p124 = por %p122, %p123
      %p125 = scmp.ne.s32.totalorder %s117, %s120
      %p126 = scmp.eq.s32.totalorder %s25, 0
      %p127 = por %p125, %p126
      %p128 = scmp.ne.s32.totalorder %s117, %s120
      %p129 = scmp.eq.s32.totalorder %s30, 1
      %p130 = por %p128, %p129
      %p131 = scmp.ne.s32.totalorder %s120, %s121
      %p132 = scmp.eq.s32.totalorder %s30, 0
      %p133 = por %p131, %p132
      %p134 = scmp.ne.s32.totalorder %s120, %s121
      %p135 = scmp.eq.s32.totalorder %s31, 1
      %p136 = por %p134, %p135
      %p138 = scmp.ne.s32.totalorder %s121, %s137
      %p139 = scmp.eq.s32.totalorder %s31, 0
      %p140 = por %p138, %p139
      %s142 = sadd.s32 %s141, 1
      %p145 = scmp.eq.s32.totalorder %s25, 1
      %p146 = scmp.ne.s32.totalorder %s141, %s143
      %p147 = scmp.eq.s32.totalorder %s25, 0
      %p148 = por %p146, %p147
      %p149 = scmp.ne.s32.totalorder %s141, %s143
      %p150 = scmp.eq.s32.totalorder %s30, 1
      %p151 = por %p149, %p150
      %p152 = scmp.ne.s32.totalorder %s143, %s144
      %p153 = scmp.eq.s32.totalorder %s30, 0
      %p154 = por %p152, %p153
      %p155 = scmp.ne.s32.totalorder %s143, %s144
      %p156 = scmp.eq.s32.totalorder %s31, 1
      %p157 = por %p155, %p156
      %p159 = scmp.ne.s32.totalorder %s144, %s158
      %p160 = scmp.eq.s32.totalorder %s31, 0
      %p161 = por %p159, %p160
      %s162 = ssub.s32 %s32, %s44
      %s163 = ssub.s32 %s33, %s40
      %s164 = sor.u32 %s162, %s163
      %p165 = scmp.eq.s32.totalorder %s164, 0
      %s167 = sadd.s32 %s166, 1
      %s168 = scalar_select %p165, %s166, %s167
      %p171 = pneg %p165
      %p172 = scmp.eq.s32.totalorder %s25, 1
      %p173 = por %p171, %p172
      %p174 = scmp.ne.s32.totalorder %s166, %s169
      %p175 = scmp.eq.s32.totalorder %s25, 0
      %p176 = por %p174, %p175
      %p177 = scmp.ne.s32.totalorder %s166, %s169
      %p178 = scmp.eq.s32.totalorder %s30, 1
      %p179 = por %p177, %p178
      %p180 = scmp.ne.s32.totalorder %s169, %s170
      %p181 = scmp.eq.s32.totalorder %s30, 0
      %p182 = por %p180, %p181
      %p183 = scmp.ne.s32.totalorder %s169, %s170
      %p184 = scmp.eq.s32.totalorder %s31, 1
      %p185 = por %p183, %p184
      %p187 = scmp.ne.s32.totalorder %s170, %s186
      %p188 = scmp.eq.s32.totalorder %s31, 0
      %p189 = por %p187, %p188
      %s190 = ssub.s32 %s32, %s44
      %s191 = ssub.s32 %s33, %s40
      %s192 = sor.u32 %s190, %s191
      %p193 = scmp.eq.s32.totalorder %s192, 0
      %s195 = sadd.s32 %s194, 1
      %s196 = scalar_select %p193, %s194, %s195
      %p199 = pneg %p193
      %p200 = scmp.eq.s32.totalorder %s25, 1
      %p201 = por %p199, %p200
      %p202 = scmp.ne.s32.totalorder %s194, %s197
      %p203 = scmp.eq.s32.totalorder %s25, 0
      %p204 = por %p202, %p203
      %p205 = scmp.ne.s32.totalorder %s194, %s197
      %p206 = scmp.eq.s32.totalorder %s30, 1
      %p207 = por %p205, %p206
      %p208 = scmp.ne.s32.totalorder %s197, %s198
      %p209 = scmp.eq.s32.totalorder %s30, 0
      %p210 = por %p208, %p209
      %p211 = scmp.ne.s32.totalorder %s197, %s198
      %p212 = scmp.eq.s32.totalorder %s31, 1
      %p213 = por %p211, %p212
      %p215 = scmp.ne.s32.totalorder %s198, %s214
      %p216 = scmp.eq.s32.totalorder %s31, 0
      %p217 = por %p215, %p216
      %p218 = scmp.le.s32.totalorder 1, %s25
      %p219 = scmp.lt.s32.totalorder %s25, 3
      %p220 = pnand %p218, %p219
      %p221 = pneg %p220
      // Predicated region
      $region9: #{tpu_custom_call.1} parent=5 // pred_check
        _
      $region10: #{tpu_custom_call.1} parent=5 // pred_check_branch
        %223 = sbr.rel (%p220) target = $region12
      $region11: #{tpu_custom_call.1} parent=5 // pred_region
        %s224 = ssub.s32 %s25, 1
        // Predicated region
        $region13: #{tpu_custom_call.1} parent=11 // pred_check
          %p225 = pneg %p154
        $region14: #{tpu_custom_call.1} parent=11 // pred_check_branch
          %227 = sbr.rel (%p225) target = $region16
        $region15: #{tpu_custom_call.1} parent=11 // pred_region
          %s229 = ssub.s32 6144, 6144
          %230 = vsyncadd [#allocation9], %s229
          %s231 = sshll.u32 [#allocation8], 4
          %s232 = int_to_ptr.vmem [resolvable:$true] %s231
          %237 = dma.hbm_to_vmem [thread:$0]  %s3, 6144, %s232, [#allocation9], 128, 128, 8
        $region16: #{tpu_custom_call.1} parent=11 // pred_fallthru
          _
      $region12: #{tpu_custom_call.1} parent=5 // pred_fallthru
        _
      %p238 = scmp.lt.s32.totalorder %s25, 2
      // Predicated region
      $region17: #{tpu_custom_call.1} parent=5 // pred_check
        %p239 = pneg %p238
      $region18: #{tpu_custom_call.1} parent=5 // pred_check_branch
        %241 = sbr.rel (%p239) target = $region20
      $region19: #{tpu_custom_call.1} parent=5 // pred_region
        // Predicated region
        $region21: #{tpu_custom_call.1} parent=19 // pred_check
          %p242 = pneg %p59
        $region22: #{tpu_custom_call.1} parent=19 // pred_check_branch
          %244 = sbr.rel (%p242) target = $region24
        $region23: #{tpu_custom_call.1} parent=19 // pred_region
          %s245 = sand.u32 %s49, 1
          %s246 = scalar_lea.sflag [#allocation3], %s245
          %s247 = sand.u32 %s49, 1
          %s248 = smul.addr %s247, 16
          %s249 = scalar_lea.vmem [#allocation2], %s248
          %s250 = smul.u32 2, %s33
          %s252 = ssub.s32 256, 256
          %253 = vsyncadd %s246, %s252
          %s254 = smul.addr %s32, 2
          %s255 = sadd.s32 %s250, %s254
          %s256 = smul.addr %s255, 128
          %s257 = scalar_lea.hbm %s0, %s256
          %s258 = sshll.u32 %s249, 4
          %s259 = int_to_ptr.vmem [resolvable:$true] %s258
          %264 = dma.hbm_to_vmem [thread:$0]  %s257, 256, %s259, %s246, 128, 128, 8
        $region24: #{tpu_custom_call.1} parent=19 // pred_fallthru
          _
        // Predicated region
        $region25: #{tpu_custom_call.1} parent=19 // pred_check
          %p265 = pneg %p93
        $region26: #{tpu_custom_call.1} parent=19 // pred_check_branch
          %267 = sbr.rel (%p265) target = $region28
        $region27: #{tpu_custom_call.1} parent=19 // pred_region
          %s268 = sand.u32 %s25, 1
          %s269 = scalar_lea.sflag [#allocation6], %s268
          %s270 = sand.u32 %s83, 1
          %s271 = smul.addr %s270, 16
          %s272 = scalar_lea.vmem [#allocation5], %s271
          %s273 = ssub.s32 %s33, 1
          %p274 = scmp.gt.s32.totalorder %s273, 0
          %s275 = scalar_select %p274, %s273, 0
          %s276 = smul.u32 2, %s275
          %s278 = ssub.s32 256, 256
          %279 = vsyncadd %s269, %s278
          %s280 = smul.addr %s32, 2
          %s281 = sadd.s32 %s276, %s280
          %s282 = smul.addr %s281, 128
          %s283 = scalar_lea.hbm %s1, %s282
          %s284 = sshll.u32 %s272, 4
          %s285 = int_to_ptr.vmem [resolvable:$true] %s284
          %290 = dma.hbm_to_vmem [thread:$0]  %s283, 256, %s285, %s269, 128, 128, 8
        $region28: #{tpu_custom_call.1} parent=19 // pred_fallthru
          _
        // Predicated region
        $region29: #{tpu_custom_call.1} parent=19 // pred_check
          %p291 = pneg %p127
        $region30: #{tpu_custom_call.1} parent=19 // pred_check_branch
          %293 = sbr.rel (%p291) target = $region32
        $region31: #{tpu_custom_call.1} parent=19 // pred_region
          %s294 = sand.u32 %s25, 1
          %s295 = scalar_lea.sflag [#allocation6], %s294
          %s296 = sand.u32 %s117, 1
          %s297 = smul.addr %s296, 16
          %s298 = scalar_lea.vmem [#allocation7], %s297
          %s299 = sadd.s32 %s33, 1
          %p300 = scmp.lt.s32.totalorder %s299, 0
          %s301 = scalar_select %p300, %s299, 0
          %s302 = smul.u32 2, %s301
          %s304 = ssub.s32 256, 256
          %305 = vsyncadd %s295, %s304
          %s306 = smul.addr %s32, 2
          %s307 = sadd.s32 %s302, %s306
          %s308 = smul.addr %s307, 128
          %s309 = scalar_lea.hbm %s2, %s308
          %s310 = sshll.u32 %s298, 4
          %s311 = int_to_ptr.vmem [resolvable:$true] %s310
          %316 = dma.hbm_to_vmem [thread:$0]  %s309, 256, %s311, %s295, 128, 128, 8
        $region32: #{tpu_custom_call.1} parent=19 // pred_fallthru
          _
      $region20: #{tpu_custom_call.1} parent=5 // pred_fallthru
        _
      %p317 = scmp.le.s32.totalorder 1, %s25
      %p318 = scmp.lt.s32.totalorder %s25, 3
      %p319 = pnand %p317, %p318
      %p320 = pneg %p319
      // Predicated region
      $region33: #{tpu_custom_call.1} parent=5 // pred_check
        _
      $region34: #{tpu_custom_call.1} parent=5 // pred_check_branch
        %322 = sbr.rel (%p319) target = $region36
      $region35: #{tpu_custom_call.1} parent=5 // pred_region
        %s323 = ssub.s32 %s25, 1
        %s324 = sand.u32 %s52, 1
        %s325 = scalar_lea.sflag [#allocation3], %s324
        %s326 = sand.u32 %s52, 1
        %s327 = smul.addr %s326, 16
        %s328 = scalar_lea.vmem [#allocation2], %s327
        // Predicated region
        $region37: #{tpu_custom_call.1} parent=35 // pred_check
          %p329 = pneg %p65
        $region38: #{tpu_custom_call.1} parent=35 // pred_check_branch
          %331 = sbr.rel (%p329) target = $region40
        $region39: #{tpu_custom_call.1} parent=35 // pred_region
          %332 = dma.done %s325, 256
        $region40: #{tpu_custom_call.1} parent=35 // pred_fallthru
          _
        %s333 = sand.u32 %s30, 1
        %s334 = scalar_lea.sflag [#allocation6], %s333
        %s335 = sand.u32 %s86, 1
        %s336 = smul.addr %s335, 16
        %s337 = scalar_lea.vmem [#allocation5], %s336
        // Predicated region
        $region41: #{tpu_custom_call.1} parent=35 // pred_check
          %p338 = pneg %p99
        $region42: #{tpu_custom_call.1} parent=35 // pred_check_branch
          %340 = sbr.rel (%p338) target = $region44
        $region43: #{tpu_custom_call.1} parent=35 // pred_region
          %341 = dma.done %s334, 256
        $region44: #{tpu_custom_call.1} parent=35 // pred_fallthru
          _
        %s342 = sand.u32 %s30, 1
        %s343 = scalar_lea.sflag [#allocation6], %s342
        %s344 = sand.u32 %s120, 1
        %s345 = smul.addr %s344, 16
        %s346 = scalar_lea.vmem [#allocation7], %s345
        // Predicated region
        $region45: #{tpu_custom_call.1} parent=35 // pred_check
          %p347 = pneg %p133
        $region46: #{tpu_custom_call.1} parent=35 // pred_check_branch
          %349 = sbr.rel (%p347) target = $region48
        $region47: #{tpu_custom_call.1} parent=35 // pred_region
          %350 = dma.done %s343, 256
        $region48: #{tpu_custom_call.1} parent=35 // pred_fallthru
          _
        // Predicated region
        $region49: #{tpu_custom_call.1} parent=35 // pred_check
          %p351 = pneg %p154
        $region50: #{tpu_custom_call.1} parent=35 // pred_check_branch
          %353 = sbr.rel (%p351) target = $region52
        $region51: #{tpu_custom_call.1} parent=35 // pred_region
          %354 = dma.done [#allocation9], 6144
        $region52: #{tpu_custom_call.1} parent=35 // pred_fallthru
          _
        %s355 = sand.u32 %s52, 1
        %s356 = scalar_lea.sflag [#allocation3], %s355
        %s357 = sand.u32 %s52, 1
        %s358 = smul.addr %s357, 16
        %s359 = scalar_lea.vmem [#allocation2], %s358
        %p360 = pneg %p65
        %p361 = pneg %p62
        %s362 = sand.u32 %s30, 1
        %s363 = scalar_lea.sflag [#allocation6], %s362
        %s364 = sand.u32 %s86, 1
        %s365 = smul.addr %s364, 16
        %s366 = scalar_lea.vmem [#allocation5], %s365
        %p367 = pneg %p99
        %p368 = pneg %p96
        %s369 = sand.u32 %s30, 1
        %s370 = scalar_lea.sflag [#allocation6], %s369
        %s371 = sand.u32 %s120, 1
        %s372 = smul.addr %s371, 16
        %s373 = scalar_lea.vmem [#allocation7], %s372
        %p374 = pneg %p133
        %p375 = pneg %p130
        %p376 = pneg %p154
        %p377 = pneg %p151
        %p378 = pneg %p182
        %p379 = pneg %p179
        %s380 = sand.u32 %s169, 1
        %s381 = scalar_lea.sflag [#allocation4], %s380
        %s382 = sand.u32 %s169, 1
        %s383 = smul.addr %s382, 16
        %s384 = scalar_lea.vmem [#allocation10], %s383
        %p385 = pneg %p210
        %p386 = pneg %p207
        %s387 = sand.u32 %s197, 1
        %s388 = scalar_lea.sflag [#allocation12], %s387
        %s389 = sand.u32 %s197, 1
        %s390 = smul.addr %s389, 2
        %s391 = scalar_lea.vmem [#allocation11], %s390
        %s392 = smul.u32 2, %s35
        %s393 = ssub.s32 %s35, 1
        %p394 = scmp.gt.s32.totalorder %s393, 0
        %s395 = scalar_select %p394, %s393, 0
        %s396 = smul.u32 2, %s395
        %s397 = sadd.s32 %s35, 1
        %p398 = scmp.lt.s32.totalorder %s397, 0
        %s399 = scalar_select %p398, %s397, 0
        %s400 = smul.u32 2, %s399
        %s401 = smul.u32 2, %s35
        %v402 = vld [vmem:[%s328] sm:$0xff]
        %v403 = vld [vmem:[%s328 + $0x8] sm:$0xff]
        %p404 = scmp.gt.s32.totalorder %s35, 0
        %v405 = vld [vmem:[%s337 + $0xf] sm:$0x1]
        %s406 = scalar_select %p404, 1, 0
        %v407 = vstv %s406
        %vm408 = vcmp.eq.s32.totalorder %v407, 1
        %v409 = vsel %vm408, %v405, 0.0
        %p410 = scmp.lt.s32.totalorder %s35, 0
        %v411 = vld [vmem:[%s346] sm:$0x1]
        %s412 = scalar_select %p410, 1, 0
        %v413 = vstv %s412
        %vm414 = vcmp.eq.s32.totalorder %v413, 1
        %v415 = vsel %vm414, %v411, 0.0
        %vm418 = vcmask 1040384
        %v419 = vrot.slane %v402, 7
        %v420 = vrot.slane %v403, 7
        %v421 = vsel %vm418, %v419, %v420
        %v426 = vrot.slane %v415, 7
        %v428 = vsel %vm418, %v409, %v419
        %v429 = vsel %vm418, %v420, %v426
        %v430 = vld [vmem:[#allocation8] sm:$0xff]
        %v431 = vld [vmem:[#allocation8 + $0x8] sm:$0xff]
        %v432 = vld [vmem:[#allocation8 + $0x10] sm:$0xff]
        %v433 = vld [vmem:[#allocation8 + $0x18] sm:$0xff]
        %v434 = vld [vmem:[#allocation8 + $0x20] sm:$0xff]
        %v435 = vld [vmem:[#allocation8 + $0x28] sm:$0xff]
        %v436 = vld [vmem:[#allocation8 + $0x30] sm:$0xff]
        %v437 = vld [vmem:[#allocation8 + $0x38] sm:$0xff]
        %v438 = vld [vmem:[#allocation8 + $0x40] sm:$0xff]
        %v439 = vld [vmem:[#allocation8 + $0x48] sm:$0xff]
        %v440 = vld [vmem:[#allocation8 + $0x50] sm:$0xff]
        %v441 = vld [vmem:[#allocation8 + $0x58] sm:$0xff]
        %v442 = vld [vmem:[#allocation8 + $0x60] sm:$0xff]
        %v443 = vld [vmem:[#allocation8 + $0x68] sm:$0xff]
        %v444 = vld [vmem:[#allocation8 + $0x70] sm:$0xff]
        %v445 = vld [vmem:[#allocation8 + $0x78] sm:$0xff]
        %s446 = scalar_lea.vmem [#allocation8], 128
        %v447 = vld [vmem:[%s446] sm:$0xff]
        %v448 = vld [vmem:[%s446 + $0x8] sm:$0xff]
        %v449 = vld [vmem:[%s446 + $0x10] sm:$0xff]
        %v450 = vld [vmem:[%s446 + $0x18] sm:$0xff]
        %v451 = vld [vmem:[%s446 + $0x20] sm:$0xff]
        %v452 = vld [vmem:[%s446 + $0x28] sm:$0xff]
        %v453 = vld [vmem:[%s446 + $0x30] sm:$0xff]
        %v454 = vld [vmem:[%s446 + $0x38] sm:$0xff]
        %v455 = vld [vmem:[%s446 + $0x40] sm:$0xff]
        %v456 = vld [vmem:[%s446 + $0x48] sm:$0xff]
        %v457 = vld [vmem:[%s446 + $0x50] sm:$0xff]
        %v458 = vld [vmem:[%s446 + $0x58] sm:$0xff]
        %v459 = vld [vmem:[%s446 + $0x60] sm:$0xff]
        %v460 = vld [vmem:[%s446 + $0x68] sm:$0xff]
        %v461 = vld [vmem:[%s446 + $0x70] sm:$0xff]
        %v462 = vld [vmem:[%s446 + $0x78] sm:$0xff]
        %vm465 = vcmask 1046528
        %v466 = vrot.slane %v428, 1
        %v467 = vrot.slane %v421, 1
        %v468 = vsel %vm465, %v466, %v467
        %v469 = vrot.slane %v429, 1
        %v470 = vsel %vm465, %v467, %v469
        %473 = vmatprep.subr.mxu0 0.0
        %474 = vmatpush1.msra.mxu0 %v462
        %475 = vmatprep.subr.mxu0 0.0
        %476 = vmatpush1.msra.mxu0 %v461
        %477 = vmatprep.subr.mxu0 0.0
        %478 = vmatpush1.msra.mxu0 %v460
        %479 = vmatprep.subr.mxu0 0.0
        %480 = vmatpush1.msra.mxu0 %v459
        %481 = vmatprep.subr.mxu0 0.0
        %482 = vmatpush1.msra.mxu0 %v458
        %483 = vmatprep.subr.mxu0 0.0
        %484 = vmatpush1.msra.mxu0 %v457
        %485 = vmatprep.subr.mxu0 0.0
        %486 = vmatpush1.msra.mxu0 %v456
        %487 = vmatprep.subr.mxu0 0.0
        %488 = vmatpush1.msra.mxu0 %v455
        %489 = vmatprep.subr.mxu0 0.0
        %490 = vmatpush1.msra.mxu0 %v454
        %491 = vmatprep.subr.mxu0 0.0
        %492 = vmatpush1.msra.mxu0 %v453
        %493 = vmatprep.subr.mxu0 0.0
        %494 = vmatpush1.msra.mxu0 %v452
        %495 = vmatprep.subr.mxu0 0.0
        %496 = vmatpush1.msra.mxu0 %v451
        %497 = vmatprep.subr.mxu0 0.0
        %498 = vmatpush1.msra.mxu0 %v450
        %499 = vmatprep.subr.mxu0 0.0
        %500 = vmatpush1.msra.mxu0 %v449
        %501 = vmatprep.subr.mxu0 0.0
        %502 = vmatpush1.msra.mxu0 %v448
        %503 = vmatprep.subr.mxu0 0.0
        %504 = vmatpush1.msra.mxu0 %v447
        %505 = vmatprep.subr.mxu0 0.0
        %506 = vmatpush2.msra.mxu0 0.0
        %507 = vmatprep.subr.mxu0 0.0
        %508 = vmatpush2.msra.mxu0 0.0
        %509 = vmatprep.subr.mxu0 0.0
        %510 = vmatpush2.msra.mxu0 0.0
        %511 = vmatprep.subr.mxu0 0.0
        %512 = vmatpush2.msra.mxu0 0.0
        %513 = vmatprep.subr.mxu0 0.0
        %514 = vmatpush2.msra.mxu0 0.0
        %515 = vmatprep.subr.mxu0 0.0
        %516 = vmatpush2.msra.mxu0 0.0
        %517 = vmatprep.subr.mxu0 0.0
        %518 = vmatpush2.msra.mxu0 0.0
        %519 = vmatprep.subr.mxu0 0.0
        %520 = vmatpush2.msra.mxu0 0.0
        %521 = vmatprep.subr.mxu0 0.0
        %522 = vmatpush2.msra.mxu0 0.0
        %523 = vmatprep.subr.mxu0 0.0
        %524 = vmatpush2.msra.mxu0 0.0
        %525 = vmatprep.subr.mxu0 0.0
        %526 = vmatpush2.msra.mxu0 0.0
        %527 = vmatprep.subr.mxu0 0.0
        %528 = vmatpush2.msra.mxu0 0.0
        %529 = vmatprep.subr.mxu0 0.0
        %530 = vmatpush2.msra.mxu0 0.0
        %531 = vmatprep.subr.mxu0 0.0
        %532 = vmatpush2.msra.mxu0 0.0
        %533 = vmatprep.subr.mxu0 0.0
        %534 = vmatpush2.msra.mxu0 0.0
        %535 = vmatprep.subr.mxu0 0.0
        %536 = vmatpush2.msra.mxu0 0.0
        %537 = vmatprep.mubr.f32.mxu0 0.0
        %538 = vmatmul.mubr.f32.gmra.mxu0 %v468
        %v539 = vpop.f32.mrf.mxu0
        %v540 = vadd.f32 0.0, %v539
        %v541 = vpop.f32.mrf.mxu0
        %542 = vmatprep.mubr.f32.mxu0 0.0
        %543 = vmatmul.mubr.f32.gmra.mxu0 %v470
        %v544 = vpop.f32.mrf.mxu0
        %v545 = vadd.f32 0.0, %v544
        %v546 = vpop.f32.mrf.mxu0
        %547 = vdwg.mxu0
        %548 = vmatprep.subr.mxu0 0.0
        %549 = vmatpush1.msra.mxu0 %v445
        %550 = vmatprep.subr.mxu0 0.0
        %551 = vmatpush1.msra.mxu0 %v444
        %552 = vmatprep.subr.mxu0 0.0
        %553 = vmatpush1.msra.mxu0 %v443
        %554 = vmatprep.subr.mxu0 0.0
        %555 = vmatpush1.msra.mxu0 %v442
        %556 = vmatprep.subr.mxu0 0.0
        %557 = vmatpush1.msra.mxu0 %v441
        %558 = vmatprep.subr.mxu0 0.0
        %559 = vmatpush1.msra.mxu0 %v440
        %560 = vmatprep.subr.mxu0 0.0
        %561 = vmatpush1.msra.mxu0 %v439
        %562 = vmatprep.subr.mxu0 0.0
        %563 = vmatpush1.msra.mxu0 %v438
        %564 = vmatprep.subr.mxu0 0.0
        %565 = vmatpush1.msra.mxu0 %v437
        %566 = vmatprep.subr.mxu0 0.0
        %567 = vmatpush1.msra.mxu0 %v436
        %568 = vmatprep.subr.mxu0 0.0
        %569 = vmatpush1.msra.mxu0 %v435
        %570 = vmatprep.subr.mxu0 0.0
        %571 = vmatpush1.msra.mxu0 %v434
        %572 = vmatprep.subr.mxu0 0.0
        %573 = vmatpush1.msra.mxu0 %v433
        %574 = vmatprep.subr.mxu0 0.0
        %575 = vmatpush1.msra.mxu0 %v432
        %576 = vmatprep.subr.mxu0 0.0
        %577 = vmatpush1.msra.mxu0 %v431
        %578 = vmatprep.subr.mxu0 0.0
        %579 = vmatpush1.msra.mxu0 %v430
        %580 = vmatprep.subr.mxu0 0.0
        %581 = vmatpush2.msra.mxu0 0.0
        %582 = vmatprep.subr.mxu0 0.0
        %583 = vmatpush2.msra.mxu0 0.0
        %584 = vmatprep.subr.mxu0 0.0
        %585 = vmatpush2.msra.mxu0 0.0
        %586 = vmatprep.subr.mxu0 0.0
        %587 = vmatpush2.msra.mxu0 0.0
        %588 = vmatprep.subr.mxu0 0.0
        %589 = vmatpush2.msra.mxu0 0.0
        %590 = vmatprep.subr.mxu0 0.0
        %591 = vmatpush2.msra.mxu0 0.0
        %592 = vmatprep.subr.mxu0 0.0
        %593 = vmatpush2.msra.mxu0 0.0
        %594 = vmatprep.subr.mxu0 0.0
        %595 = vmatpush2.msra.mxu0 0.0
        %596 = vmatprep.subr.mxu0 0.0
        %597 = vmatpush2.msra.mxu0 0.0
        %598 = vmatprep.subr.mxu0 0.0
        %599 = vmatpush2.msra.mxu0 0.0
        %600 = vmatprep.subr.mxu0 0.0
        %601 = vmatpush2.msra.mxu0 0.0
        %602 = vmatprep.subr.mxu0 0.0
        %603 = vmatpush2.msra.mxu0 0.0
        %604 = vmatprep.subr.mxu0 0.0
        %605 = vmatpush2.msra.mxu0 0.0
        %606 = vmatprep.subr.mxu0 0.0
        %607 = vmatpush2.msra.mxu0 0.0
        %608 = vmatprep.subr.mxu0 0.0
        %609 = vmatpush2.msra.mxu0 0.0
        %610 = vmatprep.subr.mxu0 0.0
        %611 = vmatpush2.msra.mxu0 0.0
        %612 = vmatprep.mubr.f32.mxu0 0.0
        %613 = vmatmul.mubr.f32.gmra.mxu0 %v428
        %v614 = vpop.f32.mrf.mxu0
        %v615 = vadd.f32 %v540, %v614
        %v616 = vpop.f32.mrf.mxu0
        %617 = vmatprep.mubr.f32.mxu0 0.0
        %618 = vmatmul.mubr.f32.gmra.mxu0 %v421
        %v619 = vpop.f32.mrf.mxu0
        %v620 = vadd.f32 %v545, %v619
        %v621 = vpop.f32.mrf.mxu0
        %622 = vdwg.mxu0
        %s623 = scalar_lea.vmem [#allocation8], 256
        %v624 = vld [vmem:[%s623] sm:$0xff]
        %v625 = vld [vmem:[%s623 + $0x8] sm:$0xff]
        %v626 = vld [vmem:[%s623 + $0x10] sm:$0xff]
        %v627 = vld [vmem:[%s623 + $0x18] sm:$0xff]
        %v628 = vld [vmem:[%s623 + $0x20] sm:$0xff]
        %v629 = vld [vmem:[%s623 + $0x28] sm:$0xff]
        %v630 = vld [vmem:[%s623 + $0x30] sm:$0xff]
        %v631 = vld [vmem:[%s623 + $0x38] sm:$0xff]
        %v632 = vld [vmem:[%s623 + $0x40] sm:$0xff]
        %v633 = vld [vmem:[%s623 + $0x48] sm:$0xff]
        %v634 = vld [vmem:[%s623 + $0x50] sm:$0xff]
        %v635 = vld [vmem:[%s623 + $0x58] sm:$0xff]
        %v636 = vld [vmem:[%s623 + $0x60] sm:$0xff]
        %v637 = vld [vmem:[%s623 + $0x68] sm:$0xff]
        %v638 = vld [vmem:[%s623 + $0x70] sm:$0xff]
        %v639 = vld [vmem:[%s623 + $0x78] sm:$0xff]
        %vm640 = vcmask 1045504
        %v641 = vrot.slane %v428, 2
        %v642 = vrot.slane %v421, 2
        %v643 = vsel %vm640, %v641, %v642
        %v644 = vrot.slane %v429, 2
        %v645 = vsel %vm640, %v642, %v644
        %648 = vmatprep.subr.mxu0 0.0
        %649 = vmatpush1.msra.mxu0 %v639
        %650 = vmatprep.subr.mxu0 0.0
        %651 = vmatpush1.msra.mxu0 %v638
        %652 = vmatprep.subr.mxu0 0.0
        %653 = vmatpush1.msra.mxu0 %v637
        %654 = vmatprep.subr.mxu0 0.0
        %655 = vmatpush1.msra.mxu0 %v636
        %656 = vmatprep.subr.mxu0 0.0
        %657 = vmatpush1.msra.mxu0 %v635
        %658 = vmatprep.subr.mxu0 0.0
        %659 = vmatpush1.msra.mxu0 %v634
        %660 = vmatprep.subr.mxu0 0.0
        %661 = vmatpush1.msra.mxu0 %v633
        %662 = vmatprep.subr.mxu0 0.0
        %663 = vmatpush1.msra.mxu0 %v632
        %664 = vmatprep.subr.mxu0 0.0
        %665 = vmatpush1.msra.mxu0 %v631
        %666 = vmatprep.subr.mxu0 0.0
        %667 = vmatpush1.msra.mxu0 %v630
        %668 = vmatprep.subr.mxu0 0.0
        %669 = vmatpush1.msra.mxu0 %v629
        %670 = vmatprep.subr.mxu0 0.0
        %671 = vmatpush1.msra.mxu0 %v628
        %672 = vmatprep.subr.mxu0 0.0
        %673 = vmatpush1.msra.mxu0 %v627
        %674 = vmatprep.subr.mxu0 0.0
        %675 = vmatpush1.msra.mxu0 %v626
        %676 = vmatprep.subr.mxu0 0.0
        %677 = vmatpush1.msra.mxu0 %v625
        %678 = vmatprep.subr.mxu0 0.0
        %679 = vmatpush1.msra.mxu0 %v624
        %680 = vmatprep.subr.mxu0 0.0
        %681 = vmatpush2.msra.mxu0 0.0
        %682 = vmatprep.subr.mxu0 0.0
        %683 = vmatpush2.msra.mxu0 0.0
        %684 = vmatprep.subr.mxu0 0.0
        %685 = vmatpush2.msra.mxu0 0.0
        %686 = vmatprep.subr.mxu0 0.0
        %687 = vmatpush2.msra.mxu0 0.0
        %688 = vmatprep.subr.mxu0 0.0
        %689 = vmatpush2.msra.mxu0 0.0
        %690 = vmatprep.subr.mxu0 0.0
        %691 = vmatpush2.msra.mxu0 0.0
        %692 = vmatprep.subr.mxu0 0.0
        %693 = vmatpush2.msra.mxu0 0.0
        %694 = vmatprep.subr.mxu0 0.0
        %695 = vmatpush2.msra.mxu0 0.0
        %696 = vmatprep.subr.mxu0 0.0
        %697 = vmatpush2.msra.mxu0 0.0
        %698 = vmatprep.subr.mxu0 0.0
        %699 = vmatpush2.msra.mxu0 0.0
        %700 = vmatprep.subr.mxu0 0.0
        %701 = vmatpush2.msra.mxu0 0.0
        %702 = vmatprep.subr.mxu0 0.0
        %703 = vmatpush2.msra.mxu0 0.0
        %704 = vmatprep.subr.mxu0 0.0
        %705 = vmatpush2.msra.mxu0 0.0
        %706 = vmatprep.subr.mxu0 0.0
        %707 = vmatpush2.msra.mxu0 0.0
        %708 = vmatprep.subr.mxu0 0.0
        %709 = vmatpush2.msra.mxu0 0.0
        %710 = vmatprep.subr.mxu0 0.0
        %711 = vmatpush2.msra.mxu0 0.0
        %712 = vmatprep.mubr.f32.mxu0 0.0
        %713 = vmatmul.mubr.f32.gmra.mxu0 %v643
        %v714 = vpop.f32.mrf.mxu0
        %v715 = vadd.f32 0.0, %v714
        %v716 = vpop.f32.mrf.mxu0
        %717 = vmatprep.mubr.f32.mxu0 0.0
        %718 = vmatmul.mubr.f32.gmra.mxu0 %v645
        %v719 = vpop.f32.mrf.mxu0
        %v720 = vadd.f32 0.0, %v719
        %v721 = vpop.f32.mrf.mxu0
        %722 = vdwg.mxu0
        %v723 = vadd.f32 %v615, %v715
        %v724 = vadd.f32 %v620, %v720
        %725 = vst [vmem:[%s384] sm:$0xff] %v723
        %726 = vst [vmem:[%s384 + $0x8] sm:$0xff] %v724
        %v727 = vadd.f32 %v723, %v724
        %v728 = vrot.slane %v727, 4
        %v729 = vadd.f32 %v727, %v728
        %v730 = vrot.slane %v729, 2
        %v731 = vadd.f32 %v729, %v730
        %v732 = vrot.slane %v731, 1
        %v733 = vadd.f32 %v731, %v732
        %v734 = vmul.f32 %v723, %v723
        %v735 = vmul.f32 %v724, %v724
        %v736 = vadd.f32 %v734, %v735
        %v737 = vrot.slane %v736, 4
        %v738 = vadd.f32 %v736, %v737
        %v739 = vrot.slane %v738, 2
        %v740 = vadd.f32 %v738, %v739
        %v741 = vrot.slane %v740, 1
        %v742 = vadd.f32 %v740, %v741
        %v743 = vsel %vm418, %v733, %v742
        %744 = vst [vmem:[%s391] sm:$0x3] %v743
        %s745 = sand.u32 %s169, 1
        %s746 = scalar_lea.sflag [#allocation4], %s745
        %s747 = sand.u32 %s169, 1
        %s748 = smul.addr %s747, 16
        %s749 = scalar_lea.vmem [#allocation10], %s748
        %s750 = sand.u32 %s197, 1
        %s751 = scalar_lea.sflag [#allocation12], %s750
        %s752 = sand.u32 %s197, 1
        %s753 = smul.addr %s752, 2
        %s754 = scalar_lea.vmem [#allocation11], %s753
        // Predicated region
        $region53: #{tpu_custom_call.1} parent=35 // pred_check
          %p755 = pneg %p179
        $region54: #{tpu_custom_call.1} parent=35 // pred_check_branch
          %757 = sbr.rel (%p755) target = $region56
        $region55: #{tpu_custom_call.1} parent=35 // pred_region
          %s758 = smul.u32 2, %s35
          %s760 = ssub.s32 256, 256
          %761 = vsyncadd %s746, %s760
          %s762 = smul.addr %s34, 2
          %s763 = sadd.s32 %s758, %s762
          %s764 = smul.addr %s763, 128
          %s765 = scalar_lea.hbm %s4, %s764
          %s766 = sshll.u32 %s749, 4
          %s767 = int_to_ptr.vmem [resolvable:$true] %s766
          %772 = dma.vmem_to_hbm [thread:$0]  %s767, 256, %s765, %s746, 128, 128, 8
        $region56: #{tpu_custom_call.1} parent=35 // pred_fallthru
          _
        // Predicated region
        $region57: #{tpu_custom_call.1} parent=35 // pred_check
          %p773 = pneg %p207
        $region58: #{tpu_custom_call.1} parent=35 // pred_check_branch
          %775 = sbr.rel (%p773) target = $region60
        $region59: #{tpu_custom_call.1} parent=35 // pred_region
          %s777 = ssub.s32 32, 32
          %778 = vsyncadd %s751, %s777
          %s779 = sadd.s32 %s35, %s34
          %s780 = smul.addr %s779, 32
          %s781 = scalar_lea.hbm %s5, %s780
          %s783 = sshll.u32 %s754, 4
          %s784 = int_to_ptr.vmem [resolvable:$true] %s783
          %786 = dma.vmem_to_hbm [thread:$0]  %s784, 32, %s781, %s751
        $region60: #{tpu_custom_call.1} parent=35 // pred_fallthru
          _
      $region36: #{tpu_custom_call.1} parent=5 // pred_fallthru
        _
      %p787 = scmp.le.s32.totalorder 2, %s25
      // Predicated region
      $region61: #{tpu_custom_call.1} parent=5 // pred_check
        %p788 = pneg %p787
      $region62: #{tpu_custom_call.1} parent=5 // pred_check_branch
        %790 = sbr.rel (%p788) target = $region64
      $region63: #{tpu_custom_call.1} parent=5 // pred_region
        %s791 = ssub.s32 %s25, 2
        // Predicated region
        $region65: #{tpu_custom_call.1} parent=63 // pred_check
          %p792 = pneg %p185
        $region66: #{tpu_custom_call.1} parent=63 // pred_check_branch
          %794 = sbr.rel (%p792) target = $region68
        $region67: #{tpu_custom_call.1} parent=63 // pred_region
          %s795 = sand.u32 %s170, 1
          %s796 = scalar_lea.sflag [#allocation4], %s795
          %s797 = sand.u32 %s170, 1
          %s798 = smul.addr %s797, 16
          %s799 = scalar_lea.vmem [#allocation10], %s798
          %800 = dma.done %s796, 256
        $region68: #{tpu_custom_call.1} parent=63 // pred_fallthru
          _
        // Predicated region
        $region69: #{tpu_custom_call.1} parent=63 // pred_check
          %p801 = pneg %p213
        $region70: #{tpu_custom_call.1} parent=63 // pred_check_branch
          %803 = sbr.rel (%p801) target = $region72
        $region71: #{tpu_custom_call.1} parent=63 // pred_region
          %s804 = sand.u32 %s198, 1
          %s805 = scalar_lea.sflag [#allocation12], %s804
          %s806 = sand.u32 %s198, 1
          %s807 = smul.addr %s806, 2
          %s808 = scalar_lea.vmem [#allocation11], %s807
          %809 = dma.done %s805, 32
        $region72: #{tpu_custom_call.1} parent=63 // pred_fallthru
          _
      $region64: #{tpu_custom_call.1} parent=5 // pred_fallthru
        _
    $region6: #{tpu_custom_call.1} parent=1 // loop_footer
      %s29 = sadd.s32 1, %s25
    $region7: #{tpu_custom_call.1} parent=1 // loop_footer_branch
      %24 = sbr.rel target = $region3
    $region8: #{tpu_custom_call.1} parent=1 // loop_exit
      _
    %810 = vsyncpa [#allocation3], 1
    %s811 = scalar_lea.sflag [#allocation3], 1
    %812 = vsyncpa %s811, 1
    %813 = vsyncpa [#allocation6], 1
    %s814 = scalar_lea.sflag [#allocation6], 1
    %815 = vsyncpa %s814, 1
    %816 = vsyncpa [#allocation9], 1
    %817 = vsyncpa [#allocation4], 1
    %s818 = scalar_lea.sflag [#allocation4], 1
    %819 = vsyncpa %s818, 1
    %820 = vsyncpa [#allocation12], 1
    %s821 = scalar_lea.sflag [#allocation12], 1
    %822 = vsyncpa %s821, 1

</llo_original>
